<compile_context>
chip_gen: v6e
topology: v6e:2x2x1
jax: 0.10.0
libtpu: 0.0.40
codegen_flags: <defaults>
</compile_context>

<pallas_src>
import functools

import jax
import jax.numpy as jnp
from jax import lax
from jax.experimental import pallas as pl
from jax.experimental.pallas import tpu as pltpu

GROUPS = 8
BN_EPS = 1e-5


def resblock_kernel(x_ref, w1_ref, w2_ref, w3_ref, aux_ref, o_ref, *, H, W, C):
    L = H * W
    x = x_ref[0]                                          # (C, L) f32, lane-dense

    # Column index of every pixel; computed once and shared by both 3x3 convs.
    col = lax.broadcasted_iota(jnp.int32, (C, L), 1) % W
    not_first_col = col > 0        # keep columns  > 0   (used by dx = +1 taps)
    not_last_col = col < (W - 1)   # keep columns < W-1  (used by dx = -1 taps)

    # Folded per-channel vectors (conv biases already folded into the BN shift).
    s1 = aux_ref[:, 0:1]
    t1 = aux_ref[:, 1:2]
    s2 = aux_ref[:, 2:3]
    t2 = aux_ref[:, 3:4]
    b3 = aux_ref[:, 4:5]

    def shift(v, d):
        # out[:, i] = v[:, i + d], zero-filled outside [0, L).
        if d == 0:
            return v
        z = jnp.zeros((C, abs(d)), v.dtype)
        if d > 0:
            return jnp.concatenate([v[:, d:], z], axis=1)
        return jnp.concatenate([z, v[:, :d]], axis=1)

    def conv3x3(inp, w_ref):
        # inp: (C, L) f32.  One MXU matmul: (C, 9C) @ (9C, L) -> (C, L) f32.
        v = inp.astype(jnp.bfloat16)
        # Pre-masked sources kill the horizontal wrap of the flattened lane shift:
        #   dx = +1 taps sample column w+1 -> source column 0   must not leak in,
        #   dx = -1 taps sample column w-1 -> source column W-1 must not leak in.
        v_dxp = jnp.where(not_first_col, v, jnp.zeros_like(v))
        v_dxm = jnp.where(not_last_col, v, jnp.zeros_like(v))
        src = {-1: v_dxm, 0: v, 1: v_dxp}
        taps = [shift(src[dx], dy * W + dx)
                for dy in (-1, 0, 1) for dx in (-1, 0, 1)]
        stacked = jnp.concatenate(taps, axis=0)           # (9C, L) bf16
        return jnp.dot(w_ref[...], stacked, preferred_element_type=jnp.float32)

    # conv1 (3x3, same) -> folded BN1 -> ReLU
    y = conv3x3(x, w1_ref)
    y = jnp.maximum(y * s1 + t1, 0.0)

    # conv2 (3x3, groups=8; weight pre-expanded to block-diagonal slab) -> BN2 -> ReLU
    y = conv3x3(y, w2_ref)
    y = jnp.maximum(y * s2 + t2, 0.0)

    # conv3 (1x1) == channel matmul, + bias
    y = jnp.dot(w3_ref[...], y.astype(jnp.bfloat16),
                preferred_element_type=jnp.float32) + b3

    # Residual add; lane-dense (C, H*W) output store.
    o_ref[0] = (y + x).astype(o_ref.dtype)


def resblock_pallas(x_nchw, kparams):
    N, C, H, W = x_nchw.shape
    assert C % GROUPS == 0
    w1s, w2s, w3t, aux = kparams

    # Channels-first lane-dense layout: a free reshape, no transpose.
    x = x_nchw.reshape(N, C, H * W)
    kern = functools.partial(resblock_kernel, H=H, W=W, C=C)

    out = pl.pallas_call(
        kern,
        out_shape=jax.ShapeDtypeStruct((N, C, H * W), x_nchw.dtype),
        grid_spec=pltpu.PrefetchScalarGridSpec(
            num_scalar_prefetch=0,
            grid=(N,),
            in_specs=[
                pl.BlockSpec((1, C, H * W), lambda n: (n, 0, 0)),
                pl.BlockSpec((C, 9 * C), lambda n: (0, 0)),
                pl.BlockSpec((C, 9 * C), lambda n: (0, 0)),
                pl.BlockSpec((C, C), lambda n: (0, 0)),
                pl.BlockSpec((C, 8), lambda n: (0, 0)),
            ],
            out_specs=pl.BlockSpec((1, C, H * W), lambda n: (n, 0, 0)),
        ),
        compiler_params=pltpu.CompilerParams(
            dimension_semantics=("parallel",),
            vmem_limit_bytes=32 * 1024 * 1024,
        ),
    )(x, w1s, w2s, w3t, aux)
    return out.reshape(N, C, H, W)


def init_raw_params(key, C):
    cg = C // GROUPS
    ks = jax.random.split(key, 16)
    return dict(
        # conv1: HWIO (3,3,Cin,Cout)
        w1=jax.random.normal(ks[0], (3, 3, C, C), jnp.float32) / jnp.sqrt(9.0 * C),
        b1=0.1 * jax.random.normal(ks[1], (C,), jnp.float32),
        g1=1.0 + 0.1 * jax.random.normal(ks[2], (C,), jnp.float32),
        beta1=0.1 * jax.random.normal(ks[3], (C,), jnp.float32),
        m1=0.1 * jax.random.normal(ks[4], (C,), jnp.float32),
        v1=jnp.abs(jax.random.normal(ks[5], (C,), jnp.float32)) + 0.5,
        # conv2 grouped: HWIO (3,3,Cin/groups,Cout)
        w2g=jax.random.normal(ks[6], (3, 3, cg, C), jnp.float32) / jnp.sqrt(9.0 * cg),
        b2=0.1 * jax.random.normal(ks[7], (C,), jnp.float32),
        g2=1.0 + 0.1 * jax.random.normal(ks[8], (C,), jnp.float32),
        beta2=0.1 * jax.random.normal(ks[9], (C,), jnp.float32),
        m2=0.1 * jax.random.normal(ks[10], (C,), jnp.float32),
        v2=jnp.abs(jax.random.normal(ks[11], (C,), jnp.float32)) + 0.5,
        # conv3 1x1: (Cin, Cout)
        w3=jax.random.normal(ks[12], (C, C), jnp.float32) / jnp.sqrt(float(C)),
        b3=0.1 * jax.random.normal(ks[13], (C,), jnp.float32),
    )


def kernel_params_from_raw(raw, C):
    cg = C // GROUPS

    def fold_bn(g, beta, m, v):
        s = g / jnp.sqrt(v + BN_EPS)
        return s, beta - m * s

    s1, t1 = fold_bn(raw['g1'], raw['beta1'], raw['m1'], raw['v1'])
    s2, t2 = fold_bn(raw['g2'], raw['beta2'], raw['m2'], raw['v2'])
    # Fold the conv biases into the BN shift:  bn(conv + b) = conv*s + (s*b + t).
    t1 = t1 + s1 * raw['b1']
    t2 = t2 + s2 * raw['b2']

    def to_slab(w_hwio):
        # (3,3,Cin,Cout) -> (Cout, 9*Cin); columns ordered (ky, kx, ci) to match
        # the in-kernel tap stacking order.
        return jnp.transpose(w_hwio, (3, 0, 1, 2)).reshape(C, 9 * C).astype(jnp.bfloat16)

    w1s = to_slab(raw['w1'])

    # Grouped conv2 expanded to a dense block-diagonal HWIO weight, then slab-ified.
    w2d = jnp.zeros((3, 3, C, C), jnp.float32)
    for g in range(GROUPS):
        w2d = w2d.at[:, :, g * cg:(g + 1) * cg, g * cg:(g + 1) * cg].set(
            raw['w2g'][:, :, :, g * cg:(g + 1) * cg])
    w2s = to_slab(w2d)

    # 1x1 conv as a (Cout, Cin) matmul weight.
    w3t = jnp.transpose(raw['w3']).astype(jnp.bfloat16)

    # Per-channel vectors packed into ONE (C, 8) operand: [s1, t1', s2, t2', b3, 0,0,0].
    aux = jnp.zeros((C, 8), jnp.float32)
    aux = (aux.at[:, 0].set(s1).at[:, 1].set(t1).at[:, 2].set(s2)
              .at[:, 3].set(t2).at[:, 4].set(raw['b3']))
    return (w1s, w2s, w3t, aux)


def resblock_reference(x_nchw, raw, C):
    """Pure-JAX reference (inference-mode BN), evaluated at the same bf16-operand /
    f32-accumulation precision as the kernel's MXU matmuls."""
    x = jnp.transpose(x_nchw, (0, 2, 3, 1))   # NHWC
    dn = ('NHWC', 'HWIO', 'NHWC')

    def conv(y, w, groups=1):
        return lax.conv_general_dilated(
            y.astype(jnp.bfloat16), w.astype(jnp.bfloat16), (1, 1), 'SAME',
            dimension_numbers=dn, feature_group_count=groups,
            preferred_element_type=jnp.float32)

    def bn(y, g, b, m, v):
        return (y - m) / jnp.sqrt(v + BN_EPS) * g + b

    y = conv(x, raw['w1']) + raw['b1']
    y = jnp.maximum(bn(y, raw['g1'], raw['beta1'], raw['m1'], raw['v1']), 0.0)
    y = conv(y, raw['w2g'], GROUPS) + raw['b2']
    y = jnp.maximum(bn(y, raw['g2'], raw['beta2'], raw['m2'], raw['v2']), 0.0)
    y = conv(y, raw['w3'].reshape(1, 1, C, C)) + raw['b3']
    return jnp.transpose(y + x, (0, 3, 1, 2))


if __name__ == "__main__":
    N, C, H, W = 2, 16, 16, 16   # channels must be divisible by groups=8
    key = jax.random.PRNGKey(0)
    kx, kp = jax.random.split(key)
    x = jax.random.normal(kx, (N, C, H, W), jnp.float32)   # NCHW, like PyTorch

    raw = init_raw_params(kp, C)
    kparams = kernel_params_from_raw(raw, C)

    out = jax.block_until_ready(resblock_pallas(x, kparams))
    ref = jax.block_until_ready(resblock_reference(x, raw, C))

    assert out.shape == (N, C, H, W)
    max_err = jnp.max(jnp.abs(out - ref))
    assert jnp.allclose(out, ref, atol=1e-2, rtol=1e-2), f"max abs err {max_err}"

    print("KERNEL_OK")
</pallas_src>

<mosaic_0001>
module attributes {stable_mosaic.version = 11 : i64} {
  func.func @resblock_kernel(%arg0: i32, %arg1: memref<1x16x256xf32, #tpu.memory_space<vmem>>, %arg2: memref<16x144xbf16, #tpu.memory_space<vmem>>, %arg3: memref<16x144xbf16, #tpu.memory_space<vmem>>, %arg4: memref<16x16xbf16, #tpu.memory_space<vmem>>, %arg5: memref<16x8xf32, #tpu.memory_space<vmem>>, %arg6: memref<1x16x256xf32, #tpu.memory_space<vmem>>) attributes {dimension_semantics = [#tpu.dimension_semantics<parallel>], iteration_bounds = array<i64: 2>, scalar_prefetch = 0 : i64, scratch_operands = 0 : i64, tpu.core_type = #tpu.core_type<tc>, window_params = [{transform_indices = @transform_0, window_bounds = array<i64: 1, 16, 256>}, {pipeline_mode = #tpu.pipeline_mode<synchronous>, transform_indices = @transform_1, window_bounds = array<i64: 16, 144>}, {pipeline_mode = #tpu.pipeline_mode<synchronous>, transform_indices = @transform_2, window_bounds = array<i64: 16, 144>}, {pipeline_mode = #tpu.pipeline_mode<synchronous>, transform_indices = @transform_3, window_bounds = array<i64: 16, 16>}, {pipeline_mode = #tpu.pipeline_mode<synchronous>, transform_indices = @transform_4, window_bounds = array<i64: 16, 8>}, {transform_indices = @transform_5, window_bounds = array<i64: 1, 16, 256>}]} {
    %c0 = arith.constant 0 : index
    %c0_0 = arith.constant 0 : index
    %c0_1 = arith.constant 0 : index
    %0 = vector.load %arg1[%c0, %c0_0, %c0_1] : memref<1x16x256xf32, #tpu.memory_space<vmem>>, vector<1x16x256xf32>
    %1 = vector.shape_cast %0 : vector<1x16x256xf32> to vector<16x256xf32>
    %2 = tpu.iota {dimensions = array<i32: 1>} : vector<16x256xi32>
    %c16_i32 = arith.constant 16 : i32
    %c0_i32 = arith.constant 0 : i32
    %3 = arith.cmpi eq, %c16_i32, %c0_i32 : i32
    %c1_i32 = arith.constant 1 : i32
    %4 = arith.select %3, %c1_i32, %c16_i32 : i32
    %5 = vector.broadcast %4 : i32 to vector<16x256xi32>
    %6 = arith.remsi %2, %5 : vector<16x256xi32>
    %c0_i32_2 = arith.constant 0 : i32
    %7 = vector.broadcast %c0_i32_2 : i32 to vector<16x256xi32>
    %8 = arith.cmpi ne, %6, %7 : vector<16x256xi32>
    %c0_i32_3 = arith.constant 0 : i32
    %9 = vector.broadcast %c0_i32_3 : i32 to vector<16x256xi32>
    %10 = arith.cmpi slt, %6, %9 : vector<16x256xi32>
    %c0_i32_4 = arith.constant 0 : i32
    %11 = arith.cmpi slt, %4, %c0_i32_4 : i32
    %12 = vector.broadcast %11 : i1 to vector<16x256xi1>
    %13 = vector.broadcast %12 : vector<16x256xi1> to vector<16x256xi1>
    %14 = arith.xori %10, %13 : vector<16x256xi1>
    %15 = arith.andi %14, %8 : vector<16x256xi1>
    %16 = vector.broadcast %4 : i32 to vector<16x256xi32>
    %17 = arith.addi %6, %16 : vector<16x256xi32>
    %18 = arith.select %15, %17, %6 : vector<16x256xi1>, vector<16x256xi32>
    %c0_i32_5 = arith.constant 0 : i32
    %19 = vector.broadcast %c0_i32_5 : i32 to vector<16x256xi32>
    %20 = arith.cmpi sgt, %18, %19 : vector<16x256xi32>
    %c15_i32 = arith.constant 15 : i32
    %21 = vector.broadcast %c15_i32 : i32 to vector<16x256xi32>
    %22 = arith.cmpi slt, %18, %21 : vector<16x256xi32>
    %c0_6 = arith.constant 0 : index
    %c0_7 = arith.constant 0 : index
    %23 = vector.load %arg5[%c0_6, %c0_7] : memref<16x8xf32, #tpu.memory_space<vmem>>, vector<16x1xf32>
    %c0_8 = arith.constant 0 : index
    %c1 = arith.constant 1 : index
    %24 = vector.load %arg5[%c0_8, %c1] : memref<16x8xf32, #tpu.memory_space<vmem>>, vector<16x1xf32>
    %c0_9 = arith.constant 0 : index
    %c2 = arith.constant 2 : index
    %25 = vector.load %arg5[%c0_9, %c2] : memref<16x8xf32, #tpu.memory_space<vmem>>, vector<16x1xf32>
    %c0_10 = arith.constant 0 : index
    %c3 = arith.constant 3 : index
    %26 = vector.load %arg5[%c0_10, %c3] : memref<16x8xf32, #tpu.memory_space<vmem>>, vector<16x1xf32>
    %c0_11 = arith.constant 0 : index
    %c4 = arith.constant 4 : index
    %27 = vector.load %arg5[%c0_11, %c4] : memref<16x8xf32, #tpu.memory_space<vmem>>, vector<16x1xf32>
    %28 = arith.truncf %1 : vector<16x256xf32> to vector<16x256xbf16>
    %cst = arith.constant 0.000000e+00 : bf16
    %29 = vector.broadcast %cst : bf16 to vector<16x256xbf16>
    %30 = arith.select %20, %28, %29 : vector<16x256xi1>, vector<16x256xbf16>
    %cst_12 = arith.constant 0.000000e+00 : bf16
    %31 = vector.broadcast %cst_12 : bf16 to vector<16x256xbf16>
    %32 = arith.select %22, %28, %31 : vector<16x256xi1>, vector<16x256xbf16>
    %cst_13 = arith.constant 0.000000e+00 : bf16
    %33 = vector.broadcast %cst_13 : bf16 to vector<16x17xbf16>
    %34 = vector.extract_strided_slice %32 {offsets = [0, 0], sizes = [16, 239], strides = [1, 1]} : vector<16x256xbf16> to vector<16x239xbf16>
    %35 = tpu.concatenate %33, %34 in 1 : vector<16x17xbf16>, vector<16x239xbf16> -> vector<16x256xbf16>
    %cst_14 = arith.constant 0.000000e+00 : bf16
    %36 = vector.broadcast %cst_14 : bf16 to vector<16x16xbf16>
    %37 = vector.extract_strided_slice %28 {offsets = [0, 0], sizes = [16, 240], strides = [1, 1]} : vector<16x256xbf16> to vector<16x240xbf16>
    %38 = tpu.concatenate %36, %37 in 1 : vector<16x16xbf16>, vector<16x240xbf16> -> vector<16x256xbf16>
    %cst_15 = arith.constant 0.000000e+00 : bf16
    %39 = vector.broadcast %cst_15 : bf16 to vector<16x15xbf16>
    %40 = vector.extract_strided_slice %30 {offsets = [0, 0], sizes = [16, 241], strides = [1, 1]} : vector<16x256xbf16> to vector<16x241xbf16>
    %41 = tpu.concatenate %39, %40 in 1 : vector<16x15xbf16>, vector<16x241xbf16> -> vector<16x256xbf16>
    %cst_16 = arith.constant 0.000000e+00 : bf16
    %42 = vector.broadcast %cst_16 : bf16 to vector<16x1xbf16>
    %43 = vector.extract_strided_slice %32 {offsets = [0, 0], sizes = [16, 255], strides = [1, 1]} : vector<16x256xbf16> to vector<16x255xbf16>
    %44 = tpu.concatenate %42, %43 in 1 : vector<16x1xbf16>, vector<16x255xbf16> -> vector<16x256xbf16>
    %cst_17 = arith.constant 0.000000e+00 : bf16
    %45 = vector.broadcast %cst_17 : bf16 to vector<16x1xbf16>
    %46 = vector.extract_strided_slice %30 {offsets = [0, 1], sizes = [16, 255], strides = [1, 1]} : vector<16x256xbf16> to vector<16x255xbf16>
    %47 = tpu.concatenate %46, %45 in 1 : vector<16x255xbf16>, vector<16x1xbf16> -> vector<16x256xbf16>
    %cst_18 = arith.constant 0.000000e+00 : bf16
    %48 = vector.broadcast %cst_18 : bf16 to vector<16x15xbf16>
    %49 = vector.extract_strided_slice %32 {offsets = [0, 15], sizes = [16, 241], strides = [1, 1]} : vector<16x256xbf16> to vector<16x241xbf16>
    %50 = tpu.concatenate %49, %48 in 1 : vector<16x241xbf16>, vector<16x15xbf16> -> vector<16x256xbf16>
    %cst_19 = arith.constant 0.000000e+00 : bf16
    %51 = vector.broadcast %cst_19 : bf16 to vector<16x16xbf16>
    %52 = vector.extract_strided_slice %28 {offsets = [0, 16], sizes = [16, 240], strides = [1, 1]} : vector<16x256xbf16> to vector<16x240xbf16>
    %53 = tpu.concatenate %52, %51 in 1 : vector<16x240xbf16>, vector<16x16xbf16> -> vector<16x256xbf16>
    %cst_20 = arith.constant 0.000000e+00 : bf16
    %54 = vector.broadcast %cst_20 : bf16 to vector<16x17xbf16>
    %55 = vector.extract_strided_slice %30 {offsets = [0, 17], sizes = [16, 239], strides = [1, 1]} : vector<16x256xbf16> to vector<16x239xbf16>
    %56 = tpu.concatenate %55, %54 in 1 : vector<16x239xbf16>, vector<16x17xbf16> -> vector<16x256xbf16>
    %57 = tpu.concatenate %35, %38, %41, %44, %28, %47, %50, %53, %56 in 0 : vector<16x256xbf16>, vector<16x256xbf16>, vector<16x256xbf16>, vector<16x256xbf16>, vector<16x256xbf16>, vector<16x256xbf16>, vector<16x256xbf16>, vector<16x256xbf16>, vector<16x256xbf16> -> vector<144x256xbf16>
    %c0_21 = arith.constant 0 : index
    %c0_22 = arith.constant 0 : index
    %58 = vector.load %arg2[%c0_21, %c0_22] : memref<16x144xbf16, #tpu.memory_space<vmem>>, vector<16x144xbf16>
    %cst_23 = arith.constant dense<0.000000e+00> : vector<16x256xf32>
    %59 = tpu.matmul %58, %57, %cst_23 {dimension_numbers = #tpu.dot_dimension_numbers<[1], [0], [0], [1], [0, 0, 1, 1], [], []>} : vector<16x144xbf16>, vector<144x256xbf16>, vector<16x256xf32> -> vector<16x256xf32>
    %60 = vector.broadcast %23 : vector<16x1xf32> to vector<16x256xf32>
    %61 = arith.mulf %59, %60 : vector<16x256xf32>
    %62 = vector.broadcast %24 : vector<16x1xf32> to vector<16x256xf32>
    %63 = arith.addf %61, %62 : vector<16x256xf32>
    %cst_24 = arith.constant 0.000000e+00 : f32
    %64 = vector.broadcast %cst_24 : f32 to vector<16x256xf32>
    %65 = arith.maximumf %63, %64 : vector<16x256xf32>
    %66 = arith.truncf %65 : vector<16x256xf32> to vector<16x256xbf16>
    %cst_25 = arith.constant 0.000000e+00 : bf16
    %67 = vector.broadcast %cst_25 : bf16 to vector<16x256xbf16>
    %68 = arith.select %20, %66, %67 : vector<16x256xi1>, vector<16x256xbf16>
    %cst_26 = arith.constant 0.000000e+00 : bf16
    %69 = vector.broadcast %cst_26 : bf16 to vector<16x256xbf16>
    %70 = arith.select %22, %66, %69 : vector<16x256xi1>, vector<16x256xbf16>
    %cst_27 = arith.constant 0.000000e+00 : bf16
    %71 = vector.broadcast %cst_27 : bf16 to vector<16x17xbf16>
    %72 = vector.extract_strided_slice %70 {offsets = [0, 0], sizes = [16, 239], strides = [1, 1]} : vector<16x256xbf16> to vector<16x239xbf16>
    %73 = tpu.concatenate %71, %72 in 1 : vector<16x17xbf16>, vector<16x239xbf16> -> vector<16x256xbf16>
    %cst_28 = arith.constant 0.000000e+00 : bf16
    %74 = vector.broadcast %cst_28 : bf16 to vector<16x16xbf16>
    %75 = vector.extract_strided_slice %66 {offsets = [0, 0], sizes = [16, 240], strides = [1, 1]} : vector<16x256xbf16> to vector<16x240xbf16>
    %76 = tpu.concatenate %74, %75 in 1 : vector<16x16xbf16>, vector<16x240xbf16> -> vector<16x256xbf16>
    %cst_29 = arith.constant 0.000000e+00 : bf16
    %77 = vector.broadcast %cst_29 : bf16 to vector<16x15xbf16>
    %78 = vector.extract_strided_slice %68 {offsets = [0, 0], sizes = [16, 241], strides = [1, 1]} : vector<16x256xbf16> to vector<16x241xbf16>
    %79 = tpu.concatenate %77, %78 in 1 : vector<16x15xbf16>, vector<16x241xbf16> -> vector<16x256xbf16>
    %cst_30 = arith.constant 0.000000e+00 : bf16
    %80 = vector.broadcast %cst_30 : bf16 to vector<16x1xbf16>
    %81 = vector.extract_strided_slice %70 {offsets = [0, 0], sizes = [16, 255], strides = [1, 1]} : vector<16x256xbf16> to vector<16x255xbf16>
    %82 = tpu.concatenate %80, %81 in 1 : vector<16x1xbf16>, vector<16x255xbf16> -> vector<16x256xbf16>
    %cst_31 = arith.constant 0.000000e+00 : bf16
    %83 = vector.broadcast %cst_31 : bf16 to vector<16x1xbf16>
    %84 = vector.extract_strided_slice %68 {offsets = [0, 1], sizes = [16, 255], strides = [1, 1]} : vector<16x256xbf16> to vector<16x255xbf16>
    %85 = tpu.concatenate %84, %83 in 1 : vector<16x255xbf16>, vector<16x1xbf16> -> vector<16x256xbf16>
    %cst_32 = arith.constant 0.000000e+00 : bf16
    %86 = vector.broadcast %cst_32 : bf16 to vector<16x15xbf16>
    %87 = vector.extract_strided_slice %70 {offsets = [0, 15], sizes = [16, 241], strides = [1, 1]} : vector<16x256xbf16> to vector<16x241xbf16>
    %88 = tpu.concatenate %87, %86 in 1 : vector<16x241xbf16>, vector<16x15xbf16> -> vector<16x256xbf16>
    %cst_33 = arith.constant 0.000000e+00 : bf16
    %89 = vector.broadcast %cst_33 : bf16 to vector<16x16xbf16>
    %90 = vector.extract_strided_slice %66 {offsets = [0, 16], sizes = [16, 240], strides = [1, 1]} : vector<16x256xbf16> to vector<16x240xbf16>
    %91 = tpu.concatenate %90, %89 in 1 : vector<16x240xbf16>, vector<16x16xbf16> -> vector<16x256xbf16>
    %cst_34 = arith.constant 0.000000e+00 : bf16
    %92 = vector.broadcast %cst_34 : bf16 to vector<16x17xbf16>
    %93 = vector.extract_strided_slice %68 {offsets = [0, 17], sizes = [16, 239], strides = [1, 1]} : vector<16x256xbf16> to vector<16x239xbf16>
    %94 = tpu.concatenate %93, %92 in 1 : vector<16x239xbf16>, vector<16x17xbf16> -> vector<16x256xbf16>
    %95 = tpu.concatenate %73, %76, %79, %82, %66, %85, %88, %91, %94 in 0 : vector<16x256xbf16>, vector<16x256xbf16>, vector<16x256xbf16>, vector<16x256xbf16>, vector<16x256xbf16>, vector<16x256xbf16>, vector<16x256xbf16>, vector<16x256xbf16>, vector<16x256xbf16> -> vector<144x256xbf16>
    %c0_35 = arith.constant 0 : index
    %c0_36 = arith.constant 0 : index
    %96 = vector.load %arg3[%c0_35, %c0_36] : memref<16x144xbf16, #tpu.memory_space<vmem>>, vector<16x144xbf16>
    %cst_37 = arith.constant dense<0.000000e+00> : vector<16x256xf32>
    %97 = tpu.matmul %96, %95, %cst_37 {dimension_numbers = #tpu.dot_dimension_numbers<[1], [0], [0], [1], [0, 0, 1, 1], [], []>} : vector<16x144xbf16>, vector<144x256xbf16>, vector<16x256xf32> -> vector<16x256xf32>
    %98 = vector.broadcast %25 : vector<16x1xf32> to vector<16x256xf32>
    %99 = arith.mulf %97, %98 : vector<16x256xf32>
    %100 = vector.broadcast %26 : vector<16x1xf32> to vector<16x256xf32>
    %101 = arith.addf %99, %100 : vector<16x256xf32>
    %cst_38 = arith.constant 0.000000e+00 : f32
    %102 = vector.broadcast %cst_38 : f32 to vector<16x256xf32>
    %103 = arith.maximumf %101, %102 : vector<16x256xf32>
    %c0_39 = arith.constant 0 : index
    %c0_40 = arith.constant 0 : index
    %104 = vector.load %arg4[%c0_39, %c0_40] : memref<16x16xbf16, #tpu.memory_space<vmem>>, vector<16x16xbf16>
    %105 = arith.truncf %103 : vector<16x256xf32> to vector<16x256xbf16>
    %cst_41 = arith.constant dense<0.000000e+00> : vector<16x256xf32>
    %106 = tpu.matmul %104, %105, %cst_41 {dimension_numbers = #tpu.dot_dimension_numbers<[1], [0], [0], [1], [0, 0, 1, 1], [], []>} : vector<16x16xbf16>, vector<16x256xbf16>, vector<16x256xf32> -> vector<16x256xf32>
    %107 = vector.broadcast %27 : vector<16x1xf32> to vector<16x256xf32>
    %108 = arith.addf %106, %107 : vector<16x256xf32>
    %109 = arith.addf %108, %1 : vector<16x256xf32>
    %c0_42 = arith.constant 0 : index
    %c0_43 = arith.constant 0 : index
    %c0_44 = arith.constant 0 : index
    %110 = vector.load %arg6[%c0_42, %c0_43, %c0_44] : memref<1x16x256xf32, #tpu.memory_space<vmem>>, vector<1x16x256xf32>
    %111 = vector.shape_cast %110 : vector<1x16x256xf32> to vector<16x256xf32>
    %112 = vector.shape_cast %109 : vector<16x256xf32> to vector<1x16x256xf32>
    tpu.vector_store %arg6[%c0_42, %c0_43, %c0_44], %112 {strides = array<i32>} : memref<1x16x256xf32, #tpu.memory_space<vmem>>, vector<1x16x256xf32>,
    return
  }
  func.func @transform_0(%arg0: i32) -> (i32, i32, i32) {
    %c0_i32 = arith.constant 0 : i32
    %c0_i32_0 = arith.constant 0 : i32
    %c0_i32_1 = arith.constant 0 : i32
    return %arg0, %c0_i32, %c0_i32_0 : i32, i32, i32
  }
  func.func @transform_1(%arg0: i32) -> (i32, i32) {
    %c0_i32 = arith.constant 0 : i32
    %c0_i32_0 = arith.constant 0 : i32
    %c0_i32_1 = arith.constant 0 : i32
    return %c0_i32, %c0_i32_0 : i32, i32
  }
  func.func @transform_2(%arg0: i32) -> (i32, i32) {
    %c0_i32 = arith.constant 0 : i32
    %c0_i32_0 = arith.constant 0 : i32
    %c0_i32_1 = arith.constant 0 : i32
    return %c0_i32, %c0_i32_0 : i32, i32
  }
  func.func @transform_3(%arg0: i32) -> (i32, i32) {
    %c0_i32 = arith.constant 0 : i32
    %c0_i32_0 = arith.constant 0 : i32
    %c0_i32_1 = arith.constant 0 : i32
    return %c0_i32, %c0_i32_0 : i32, i32
  }
  func.func @transform_4(%arg0: i32) -> (i32, i32) {
    %c0_i32 = arith.constant 0 : i32
    %c0_i32_0 = arith.constant 0 : i32
    %c0_i32_1 = arith.constant 0 : i32
    return %c0_i32, %c0_i32_0 : i32, i32
  }
  func.func @transform_5(%arg0: i32) -> (i32, i32, i32) {
    %c0_i32 = arith.constant 0 : i32
    %c0_i32_0 = arith.constant 0 : i32
    %c0_i32_1 = arith.constant 0 : i32
    return %arg0, %c0_i32, %c0_i32_0 : i32, i32, i32
  }
}

</mosaic_0001>

<llo_original>
// kernel: tpu_custom_call.1
$region0: #{tpu_custom_call.1}
  #allocation0 [shape = 'u32[]', space=smem, size = 0x4, offset = 0x4, fixed_abs, tag = 'smem constant byte address 0x4 - core index']
  #allocation1 [shape = 'u32[144,128]{1,0:T(1,128)}', space=vmem, size = 0x12000, scoped, tag = 'internal scratch']
  %s0 = inlined_call_operand.hbm [shape: f32[2,16,256], index: 0, kind: input, shape index: {}]
  %s1 = inlined_call_operand.vmem [shape: bf16[16,144], index: 1, kind: input, shape index: {}]
  %s2 = inlined_call_operand.hbm [shape: bf16[16,144], index: 2, kind: input, shape index: {}]
  %s3 = inlined_call_operand.vmem [shape: bf16[16,16], index: 3, kind: input, shape index: {}]
  %s4 = inlined_call_operand.vmem [shape: f32[16,8], index: 4, kind: input, shape index: {}]
  %s5 = inlined_call_operand.hbm [shape: f32[2,16,256], index: 5, kind: output, shape index: {}]
  %s6 = sld [smem:[#allocation0]]
  $region61: #{tpu_custom_call.1} parent=0
    _
  %s8 = ssub.s32 1, %s6
  %s9 = scalar_select 0, %s8, %s6
  $region1: #{tpu_custom_call.1} parent=0
    #allocation2 [shape = 'u8[32768]{0}', space=vmem, size = 0x8000, scoped, tag = 'input window, operand 0']
    #allocation3 [shape = 's32[2]{0}', space=sflag, size = 0x8, scoped, tag = 'scoped memory for tpu_custom_call.1']
    #allocation4 [shape = 's32[2]{0}', space=sflag, size = 0x8, scoped, tag = 'scoped memory for tpu_custom_call.1']
    #allocation5 [shape = 'u8[8192]{0}', space=vmem, size = 0x2000, scoped, tag = 'input window, operand 2, single buffered']
    #allocation6 [shape = 's32[1]{0}', space=sflag, size = 0x4, scoped, tag = 'scoped memory for tpu_custom_call.1']
    #allocation7 [shape = 'u8[32768]{0}', space=vmem, size = 0x8000, scoped, tag = 'output window, operand 0']
    %10 = vsyncpa [#allocation3], 0
    %s11 = scalar_lea.sflag [#allocation3], 1
    %12 = vsyncpa %s11, 0
    %13 = vsyncpa [#allocation6], 0
    %14 = vsyncpa [#allocation4], 0
    %s15 = scalar_lea.sflag [#allocation4], 1
    %16 = vsyncpa %s15, 0
    loop: start=0, step=1, limit=4
    $region2: #{tpu_custom_call.1} parent=1 // loop_pre_header
      _
    $region3: #{tpu_custom_call.1} parent=1 // loop_header
      %s18 = sphi 0, %s22
      %p19 = scmp.ge.s32.totalorder %s18, 4
      %s28 = sphi 0, %s30
      %s31 = sphi 0, %s28
      %s32 = sphi 0, %s31
      %s48 = sphi 0, %s32
      %s52 = sphi 0, %s52
      %s54 = sphi 0, %s52
      %s55 = sphi 0, %s54
      %s69 = sphi 0, %s55
      %s73 = sphi 0, %s73
      %s75 = sphi 0, %s73
      %s76 = sphi 0, %s75
      %s90 = sphi 0, %s76
      %s94 = sphi 0, %s94
      %s96 = sphi 0, %s94
      %s97 = sphi 0, %s96
      %s111 = sphi 0, %s97
      %s115 = sphi 0, %s115
      %s117 = sphi 0, %s115
      %s118 = sphi 0, %s117
      %s132 = sphi 0, %s118
      %s138 = sphi 0, %s140
      %s141 = sphi 0, %s138
      %s142 = sphi 0, %s141
      %s158 = sphi 0, %s142
    $region4: #{tpu_custom_call.1} parent=1 // loop_header_branch
      %21 = sbr.rel (%p19) target = $region8
    $region5: #{tpu_custom_call.1} parent=1 // loop_body
      %s23 = ssub.s32 %s18, 1
      %s24 = ssub.s32 %s18, 2
      %s25 = sadd.s32 %s18, 1
      %s26 = ssub.s32 %s18, %s25
      %p27 = scmp.eq.s32.totalorder %s26, 0
      %s29 = sadd.s32 %s28, 1
      %s30 = scalar_select %p27, %s28, %s29
      %p33 = pneg %p27
      %p34 = scmp.eq.s32.totalorder %s18, 1
      %p35 = por %p33, %p34
      %p36 = scmp.ne.s32.totalorder %s28, %s31
      %p37 = scmp.eq.s32.totalorder %s18, 0
      %p38 = por %p36, %p37
      %p39 = scmp.ne.s32.totalorder %s28, %s31
      %p40 = scmp.eq.s32.totalorder %s23, 1
      %p41 = por %p39, %p40
      %p42 = scmp.ne.s32.totalorder %s31, %s32
      %p43 = scmp.eq.s32.totalorder %s23, 0
      %p44 = por %p42, %p43
      %p45 = scmp.ne.s32.totalorder %s31, %s32
      %p46 = scmp.eq.s32.totalorder %s24, 1
      %p47 = por %p45, %p46
      %p49 = scmp.ne.s32.totalorder %s32, %s48
      %p50 = scmp.eq.s32.totalorder %s24, 0
      %p51 = por %p49, %p50
      %s53 = sadd.s32 %s52, 1
      %p56 = scmp.eq.s32.totalorder %s18, 1
      %p57 = scmp.ne.s32.totalorder %s52, %s54
      %p58 = scmp.eq.s32.totalorder %s18, 0
      %p59 = por %p57, %p58
      %p60 = scmp.ne.s32.totalorder %s52, %s54
      %p61 = scmp.eq.s32.totalorder %s23, 1
      %p62 = por %p60, %p61
      %p63 = scmp.ne.s32.totalorder %s54, %s55
      %p64 = scmp.eq.s32.totalorder %s23, 0
      %p65 = por %p63, %p64
      %p66 = scmp.ne.s32.totalorder %s54, %s55
      %p67 = scmp.eq.s32.totalorder %s24, 1
      %p68 = por %p66, %p67
      %p70 = scmp.ne.s32.totalorder %s55, %s69
      %p71 = scmp.eq.s32.totalorder %s24, 0
      %p72 = por %p70, %p71
      %s74 = sadd.s32 %s73, 1
      %p77 = scmp.eq.s32.totalorder %s18, 1
      %p78 = scmp.ne.s32.totalorder %s73, %s75
      %p79 = scmp.eq.s32.totalorder %s18, 0
      %p80 = por %p78, %p79
      %p81 = scmp.ne.s32.totalorder %s73, %s75
      %p82 = scmp.eq.s32.totalorder %s23, 1
      %p83 = por %p81, %p82
      %p84 = scmp.ne.s32.totalorder %s75, %s76
      %p85 = scmp.eq.s32.totalorder %s23, 0
      %p86 = por %p84, %p85
      %p87 = scmp.ne.s32.totalorder %s75, %s76
      %p88 = scmp.eq.s32.totalorder %s24, 1
      %p89 = por %p87, %p88
      %p91 = scmp.ne.s32.totalorder %s76, %s90
      %p92 = scmp.eq.s32.totalorder %s24, 0
      %p93 = por %p91, %p92
      %s95 = sadd.s32 %s94, 1
      %p98 = scmp.eq.s32.totalorder %s18, 1
      %p99 = scmp.ne.s32.totalorder %s94, %s96
      %p100 = scmp.eq.s32.totalorder %s18, 0
      %p101 = por %p99, %p100
      %p102 = scmp.ne.s32.totalorder %s94, %s96
      %p103 = scmp.eq.s32.totalorder %s23, 1
      %p104 = por %p102, %p103
      %p105 = scmp.ne.s32.totalorder %s96, %s97
      %p106 = scmp.eq.s32.totalorder %s23, 0
      %p107 = por %p105, %p106
      %p108 = scmp.ne.s32.totalorder %s96, %s97
      %p109 = scmp.eq.s32.totalorder %s24, 1
      %p110 = por %p108, %p109
      %p112 = scmp.ne.s32.totalorder %s97, %s111
      %p113 = scmp.eq.s32.totalorder %s24, 0
      %p114 = por %p112, %p113
      %s116 = sadd.s32 %s115, 1
      %p119 = scmp.eq.s32.totalorder %s18, 1
      %p120 = scmp.ne.s32.totalorder %s115, %s117
      %p121 = scmp.eq.s32.totalorder %s18, 0
      %p122 = por %p120, %p121
      %p123 = scmp.ne.s32.totalorder %s115, %s117
      %p124 = scmp.eq.s32.totalorder %s23, 1
      %p125 = por %p123, %p124
      %p126 = scmp.ne.s32.totalorder %s117, %s118
      %p127 = scmp.eq.s32.totalorder %s23, 0
      %p128 = por %p126, %p127
      %p129 = scmp.ne.s32.totalorder %s117, %s118
      %p130 = scmp.eq.s32.totalorder %s24, 1
      %p131 = por %p129, %p130
      %p133 = scmp.ne.s32.totalorder %s118, %s132
      %p134 = scmp.eq.s32.totalorder %s24, 0
      %p135 = por %p133, %p134
      %s136 = ssub.s32 %s18, %s25
      %p137 = scmp.eq.s32.totalorder %s136, 0
      %s139 = sadd.s32 %s138, 1
      %s140 = scalar_select %p137, %s138, %s139
      %p143 = pneg %p137
      %p144 = scmp.eq.s32.totalorder %s18, 1
      %p145 = por %p143, %p144
      %p146 = scmp.ne.s32.totalorder %s138, %s141
      %p147 = scmp.eq.s32.totalorder %s18, 0
      %p148 = por %p146, %p147
      %p149 = scmp.ne.s32.totalorder %s138, %s141
      %p150 = scmp.eq.s32.totalorder %s23, 1
      %p151 = por %p149, %p150
      %p152 = scmp.ne.s32.totalorder %s141, %s142
      %p153 = scmp.eq.s32.totalorder %s23, 0
      %p154 = por %p152, %p153
      %p155 = scmp.ne.s32.totalorder %s141, %s142
      %p156 = scmp.eq.s32.totalorder %s24, 1
      %p157 = por %p155, %p156
      %p159 = scmp.ne.s32.totalorder %s142, %s158
      %p160 = scmp.eq.s32.totalorder %s24, 0
      %p161 = por %p159, %p160
      %p162 = scmp.le.s32.totalorder 1, %s18
      %p163 = scmp.lt.s32.totalorder %s18, 3
      %p164 = pnand %p162, %p163
      %p165 = pneg %p164
      // Predicated region
      $region9: #{tpu_custom_call.1} parent=5 // pred_check
        _
      $region10: #{tpu_custom_call.1} parent=5 // pred_check_branch
        %167 = sbr.rel (%p164) target = $region12
      $region11: #{tpu_custom_call.1} parent=5 // pred_region
        %s168 = ssub.s32 %s18, 1
        // Predicated region
        $region13: #{tpu_custom_call.1} parent=11 // pred_check
          %p169 = pneg %p65
        $region14: #{tpu_custom_call.1} parent=11 // pred_check_branch
          %171 = sbr.rel (%p169) target = $region16
        $region15: #{tpu_custom_call.1} parent=11 // pred_region
          _
        $region16: #{tpu_custom_call.1} parent=11 // pred_fallthru
          _
        // Predicated region
        $region17: #{tpu_custom_call.1} parent=11 // pred_check
          %p172 = pneg %p86
        $region18: #{tpu_custom_call.1} parent=11 // pred_check_branch
          %174 = sbr.rel (%p172) target = $region20
        $region19: #{tpu_custom_call.1} parent=11 // pred_region
          %s176 = ssub.s32 256, 256
          %177 = vsyncadd [#allocation6], %s176
          %s178 = sshll.u32 [#allocation5], 4
          %s179 = int_to_ptr.vmem [resolvable:$true] %s178
          %184 = dma.hbm_to_vmem [thread:$0]  %s2, 256, %s179, [#allocation6], 128, 128, 8
        $region20: #{tpu_custom_call.1} parent=11 // pred_fallthru
          _
        // Predicated region
        $region21: #{tpu_custom_call.1} parent=11 // pred_check
          %p185 = pneg %p107
        $region22: #{tpu_custom_call.1} parent=11 // pred_check_branch
          %187 = sbr.rel (%p185) target = $region24
        $region23: #{tpu_custom_call.1} parent=11 // pred_region
          _
        $region24: #{tpu_custom_call.1} parent=11 // pred_fallthru
          _
        // Predicated region
        $region25: #{tpu_custom_call.1} parent=11 // pred_check
          %p188 = pneg %p128
        $region26: #{tpu_custom_call.1} parent=11 // pred_check_branch
          %190 = sbr.rel (%p188) target = $region28
        $region27: #{tpu_custom_call.1} parent=11 // pred_region
          _
        $region28: #{tpu_custom_call.1} parent=11 // pred_fallthru
          _
      $region12: #{tpu_custom_call.1} parent=5 // pred_fallthru
        _
      %p191 = scmp.lt.s32.totalorder %s18, 2
      // Predicated region
      $region29: #{tpu_custom_call.1} parent=5 // pred_check
        %p192 = pneg %p191
      $region30: #{tpu_custom_call.1} parent=5 // pred_check_branch
        %194 = sbr.rel (%p192) target = $region32
      $region31: #{tpu_custom_call.1} parent=5 // pred_region
        // Predicated region
        $region33: #{tpu_custom_call.1} parent=31 // pred_check
          %p195 = pneg %p38
        $region34: #{tpu_custom_call.1} parent=31 // pred_check_branch
          %197 = sbr.rel (%p195) target = $region36
        $region35: #{tpu_custom_call.1} parent=31 // pred_region
          %s198 = sand.u32 %s28, 1
          %s199 = scalar_lea.sflag [#allocation3], %s198
          %s200 = sand.u32 %s28, 1
          %s201 = smul.addr %s200, 32
          %s202 = scalar_lea.vmem [#allocation2], %s201
          %s204 = ssub.s32 512, 512
          %205 = vsyncadd %s199, %s204
          %s206 = smul.addr %s18, 4
          %s207 = smul.addr %s206, 128
          %s208 = scalar_lea.hbm %s0, %s207
          %s209 = sshll.u32 %s202, 4
          %s210 = int_to_ptr.vmem [resolvable:$true] %s209
          %215 = dma.hbm_to_vmem [thread:$0]  %s208, 512, %s210, %s199, 256, 256, 16
        $region36: #{tpu_custom_call.1} parent=31 // pred_fallthru
          _
      $region32: #{tpu_custom_call.1} parent=5 // pred_fallthru
        _
      %p216 = scmp.le.s32.totalorder 1, %s18
      %p217 = scmp.lt.s32.totalorder %s18, 3
      %p218 = pnand %p216, %p217
      %p219 = pneg %p218
      // Predicated region
      $region37: #{tpu_custom_call.1} parent=5 // pred_check
        _
      $region38: #{tpu_custom_call.1} parent=5 // pred_check_branch
        %221 = sbr.rel (%p218) target = $region40
      $region39: #{tpu_custom_call.1} parent=5 // pred_region
        %s222 = ssub.s32 %s18, 1
        %s223 = sand.u32 %s31, 1
        %s224 = scalar_lea.sflag [#allocation3], %s223
        %s225 = sand.u32 %s31, 1
        %s226 = smul.addr %s225, 32
        %s227 = scalar_lea.vmem [#allocation2], %s226
        // Predicated region
        $region41: #{tpu_custom_call.1} parent=39 // pred_check
          %p228 = pneg %p44
        $region42: #{tpu_custom_call.1} parent=39 // pred_check_branch
          %230 = sbr.rel (%p228) target = $region44
        $region43: #{tpu_custom_call.1} parent=39 // pred_region
          %231 = dma.done %s224, 512
        $region44: #{tpu_custom_call.1} parent=39 // pred_fallthru
          _
        // Predicated region
        $region45: #{tpu_custom_call.1} parent=39 // pred_check
          %p232 = pneg %p86
        $region46: #{tpu_custom_call.1} parent=39 // pred_check_branch
          %234 = sbr.rel (%p232) target = $region48
        $region47: #{tpu_custom_call.1} parent=39 // pred_region
          %235 = dma.done [#allocation6], 256
        $region48: #{tpu_custom_call.1} parent=39 // pred_fallthru
          _
        %s236 = sand.u32 %s31, 1
        %s237 = scalar_lea.sflag [#allocation3], %s236
        %s238 = sand.u32 %s31, 1
        %s239 = smul.addr %s238, 32
        %s240 = scalar_lea.vmem [#allocation2], %s239
        %p241 = pneg %p44
        %p242 = pneg %p41
        %p243 = pneg %p65
        %p244 = pneg %p62
        %p245 = pneg %p86
        %p246 = pneg %p83
        %p247 = pneg %p107
        %p248 = pneg %p104
        %p249 = pneg %p128
        %p250 = pneg %p125
        %p251 = pneg %p154
        %p252 = pneg %p151
        %s253 = sand.u32 %s141, 1
        %s254 = scalar_lea.sflag [#allocation4], %s253
        %s255 = sand.u32 %s141, 1
        %s256 = smul.addr %s255, 32
        %s257 = scalar_lea.vmem [#allocation7], %s256
        %v261 = vld [vmem:[%s227] sm:$0xff]
        %v262 = vld [vmem:[%s227 + $0x8] sm:$0xff]
        %v263 = vld [vmem:[%s227 + $0x10] sm:$0xff]
        %v264 = vld [vmem:[%s227 + $0x18] sm:$0xff]
        %v265 = vlaneseq
        %v266 = vand.u32 %v265, 127
        %v267 = vadd.s32 %v266, 128
        %vm268 = vcmp.lt.s32.totalorder %v266, 0
        %v269 = vsub.s32 0, %v266
        %v270 = vsel %vm268, %v269, %v266
        %v271 = vshrl.u32 %v270, 4
        %v272 = vand.u32 %v270, 15
        %v273 = vsub.s32 0, %v272
        %v274 = vsel %vm268, %v273, %v272
        %vm275 = vcmp.lt.s32.totalorder %v267, 0
        %v276 = vsub.s32 0, %v267
        %v277 = vsel %vm275, %v276, %v267
        %v278 = vshrl.u32 %v277, 4
        %v279 = vand.u32 %v277, 15
        %v280 = vsub.s32 0, %v279
        %v281 = vsel %vm275, %v280, %v279
        %vm282 = vcmp.ne.s32.totalorder %v274, 0
        %vm283 = vcmp.ne.s32.totalorder %v281, 0
        %vm284 = vcmp.lt.s32.totalorder %v274, 0
        %vm285 = vcmp.lt.s32.totalorder %v281, 0
        %vm286 = vmand %vm284, %vm282
        %vm287 = vmand %vm285, %vm283
        %v288 = vadd.s32 %v274, 16
        %v289 = vadd.s32 %v281, 16
        %v290 = vsel %vm286, %v288, %v274
        %v291 = vsel %vm287, %v289, %v281
        %vm292 = vcmp.gt.s32.totalorder %v290, 0
        %vm293 = vcmp.gt.s32.totalorder %v291, 0
        %vm294 = vcmp.lt.s32.totalorder %v290, 15
        %vm295 = vcmp.lt.s32.totalorder %v291, 15
        %v296 = vld [vmem:[%s4] sm:$0xff]
        %v297 = vld [vmem:[%s4 + $0x8] sm:$0xff]
        %v298 = vpack.c.bf16 %v263, %v261
        %v299 = vpack.c.bf16 %v264, %v262
        %vm300 = vmpackc.low %vm293, %vm292
        %v301 = vsel %vm300, 65537, 0
        %v302 = vlaneseq
        %v303 = vshrl.u32 %v302, 7
        %v304 = vsub.s32 0, %v303
        %v305 = vrot.slane %v301, %v304
        %v306 = vlaneseq
        %v307 = vshrl.u32 %v306, 7
        %v308 = vsub.s32 4, %v307
        %v309 = vrot.slane %v301, %v308
        %vm310 = vcmp.ne.s16.totalorder %v305, 0
        %vm311 = vcmp.ne.s16.totalorder %v309, 0
        %v312 = vsel %vm310, %v298, 0
        %v313 = vsel %vm311, %v299, 0
        %vm314 = vmpackc.low %vm295, %vm294
        %v315 = vsel %vm314, 65537, 0
        %v316 = vlaneseq
        %v317 = vshrl.u32 %v316, 7
        %v318 = vsub.s32 0, %v317
        %v319 = vrot.slane %v315, %v318
        %v320 = vlaneseq
        %v321 = vshrl.u32 %v320, 7
        %v322 = vsub.s32 4, %v321
        %v323 = vrot.slane %v315, %v322
        %vm324 = vcmp.ne.s16.totalorder %v319, 0
        %vm325 = vcmp.ne.s16.totalorder %v323, 0
        %v326 = vsel %vm324, %v298, 0
        %v327 = vsel %vm325, %v299, 0
        %330 = vrot.lane.b32.xlu0 %v326, 17
        %v331 = vpop.permute.xlu0 %330
        %332 = vrot.lane.b32.xlu0 %v327, 17
        %v333 = vpop.permute.xlu0 %332
        %vm334 = vcmask 138240
        %v335 = vsel %vm334, %v331, %v333
        %vm337 = vcmask 138240
        %v340 = vsel %vm337, 0, %v331
        %344 = vrot.lane.b32.xlu0 %v298, 16
        %v345 = vpop.permute.xlu0 %344
        %346 = vrot.lane.b32.xlu0 %v299, 16
        %v347 = vpop.permute.xlu0 %346
        %vm348 = vcmask 130048
        %v349 = vsel %vm348, %v345, %v347
        %vm351 = vcmask 130048
        %v353 = vsel %vm351, 0, %v345
        %357 = vrot.lane.b32.xlu0 %v312, 15
        %v358 = vpop.permute.xlu0 %357
        %359 = vrot.lane.b32.xlu0 %v313, 15
        %v360 = vpop.permute.xlu0 %359
        %vm361 = vcmask 121856
        %v362 = vsel %vm361, %v358, %v360
        %vm364 = vcmask 121856
        %v366 = vsel %vm364, 0, %v358
        %368 = vrot.lane.b32.xlu0 %v326, 1
        %v369 = vpop.permute.xlu0 %368
        %370 = vrot.lane.b32.xlu0 %v327, 1
        %v371 = vpop.permute.xlu0 %370
        %vm372 = vcmask 7168
        %v373 = vsel %vm372, %v369, %v371
        %vm375 = vcmask 7168
        %v377 = vsel %vm375, 0, %v369
        %379 = vrot.lane.b32.xlu0 %v312, 127
        %v380 = vpop.permute.xlu0 %379
        %381 = vrot.lane.b32.xlu0 %v313, 127
        %v382 = vpop.permute.xlu0 %381
        %vm383 = vcmask 1039360
        %v384 = vsel %vm383, %v380, %v382
        %vm386 = vcmask 1039360
        %v388 = vsel %vm386, %v382, 0
        %390 = vrot.lane.b32.xlu0 %v326, 113
        %v391 = vpop.permute.xlu0 %390
        %392 = vrot.lane.b32.xlu0 %v327, 113
        %v393 = vpop.permute.xlu0 %392
        %vm394 = vcmask 924672
        %v395 = vsel %vm394, %v391, %v393
        %vm397 = vcmask 924672
        %v399 = vsel %vm397, %v393, 0
        %401 = vrot.lane.b32.xlu0 %v298, 112
        %v402 = vpop.permute.xlu0 %401
        %403 = vrot.lane.b32.xlu0 %v299, 112
        %v404 = vpop.permute.xlu0 %403
        %vm405 = vcmask 916480
        %v406 = vsel %vm405, %v402, %v404
        %vm408 = vcmask 916480
        %v410 = vsel %vm408, %v404, 0
        %412 = vrot.lane.b32.xlu0 %v312, 111
        %v413 = vpop.permute.xlu0 %412
        %414 = vrot.lane.b32.xlu0 %v313, 111
        %v415 = vpop.permute.xlu0 %414
        %vm416 = vcmask 908288
        %v417 = vsel %vm416, %v413, %v415
        %vm419 = vcmask 908288
        %v421 = vsel %vm419, %v415, 0
        %v423 = vld [vmem:[%s1] sm:$0xff]
        %v424 = vld [vmem:[%s1 + $0x8] sm:$0xff]
        %v427 = vunpack.c.l.b16 %v423
        %v428 = vunpack.c.h.b16 %v423
        %v429 = vunpack.c.l.b16 %v424
        %v430 = vunpack.c.h.b16 %v424
        %v431 = vpack.c.b16 %v429, %v427
        %v432 = vpack.c.b16 %v430, %v428
        %v435 = vsel %vm351, %v432, 0
        %437 = vmatprep.subr.bf16.mxu0 %v410
        %438 = vmatpush1.bf16.msra.mxu0 %v406
        %439 = vmatprep.subr.bf16.mxu0 %v399
        %440 = vmatpush1.bf16.msra.mxu0 %v395
        %441 = vmatprep.subr.bf16.mxu0 %v388
        %442 = vmatpush1.bf16.msra.mxu0 %v384
        %443 = vmatprep.subr.bf16.mxu0 %v299
        %444 = vmatpush1.bf16.msra.mxu0 %v298
        %445 = vmatprep.subr.bf16.mxu0 %v373
        %446 = vmatpush1.bf16.msra.mxu0 %v377
        %447 = vmatprep.subr.bf16.mxu0 %v362
        %448 = vmatpush1.bf16.msra.mxu0 %v366
        %449 = vmatprep.subr.bf16.mxu0 %v349
        %450 = vmatpush1.bf16.msra.mxu0 %v353
        %451 = vmatprep.subr.bf16.mxu0 %v335
        %452 = vmatpush1.bf16.msra.mxu0 %v340
        %453 = vmatprep.subr.bf16.mxu0 0
        %454 = vmatpush2.bf16.msra.mxu0 0
        %455 = vmatprep.subr.bf16.mxu0 0
        %456 = vmatpush2.bf16.msra.mxu0 0
        %457 = vmatprep.subr.bf16.mxu0 0
        %458 = vmatpush2.bf16.msra.mxu0 0
        %459 = vmatprep.subr.bf16.mxu0 0
        %460 = vmatpush2.bf16.msra.mxu0 0
        %461 = vmatprep.subr.bf16.mxu0 0
        %462 = vmatpush2.bf16.msra.mxu0 0
        %463 = vmatprep.subr.bf16.mxu0 0
        %464 = vmatpush2.bf16.msra.mxu0 0
        %465 = vmatprep.subr.bf16.mxu0 0
        %466 = vmatpush2.bf16.msra.mxu0 0
        %467 = vmatprep.subr.bf16.mxu0 %v421
        %468 = vmatpush2.bf16.msra.mxu0 %v417
        %469 = vmatprep.mubr.bf16.mxu0 %v435
        %470 = vmatmul.mubr.bf16.gmra.mxu0 %v431
        %v471 = vpop.f32.mrf.mxu0
        %v472 = vadd.f32 0.0, %v471
        %v473 = vpop.f32.mrf.mxu0
        %v474 = vadd.f32 0.0, %v473
        %v475 = vpop.f32.mrf.mxu0
        %v476 = vadd.f32 0.0, %v475
        %v477 = vpop.f32.mrf.mxu0
        %v478 = vadd.f32 0.0, %v477
        %479 = vdwg.mxu0
        %481 = vset.pattern.permute.xlu0 0
        %482 = vperm.xlu0 %481, %v296
        %v483 = vpop.permute.xlu0 %482
        %486 = vset.pattern.permute.xlu0 0
        %487 = vperm.xlu0 %486, %v297
        %v488 = vpop.permute.xlu0 %487
        %v490 = vmul.f32 %v472, %v483
        %v491 = vmul.f32 %v474, %v483
        %v492 = vmul.f32 %v476, %v488
        %v493 = vmul.f32 %v478, %v488
        %494 = vset.pattern.permute.xlu0 1
        %495 = vperm.xlu0 %494, %v296
        %v496 = vpop.permute.xlu0 %495
        %498 = vset.pattern.permute.xlu0 1
        %499 = vperm.xlu0 %498, %v297
        %v500 = vpop.permute.xlu0 %499
        %v502 = vadd.f32 %v490, %v496
        %v503 = vadd.f32 %v491, %v496
        %v504 = vadd.f32 %v492, %v500
        %v505 = vadd.f32 %v493, %v500
        %v506 = vmax.f32 %v502, 0.0
        %v507 = vmax.f32 %v503, 0.0
        %v508 = vmax.f32 %v504, 0.0
        %v509 = vmax.f32 %v505, 0.0
        %v510 = vpack.c.bf16 %v508, %v506
        %v511 = vpack.c.bf16 %v509, %v507
        %v512 = vsel %vm310, %v510, 0
        %v513 = vsel %vm311, %v511, 0
        %v514 = vsel %vm324, %v510, 0
        %v515 = vsel %vm325, %v511, 0
        %518 = vrot.lane.b32.xlu0 %v514, 17
        %v519 = vpop.permute.xlu0 %518
        %520 = vrot.lane.b32.xlu0 %v515, 17
        %v521 = vpop.permute.xlu0 %520
        %v522 = vsel %vm334, %v519, %v521
        %v525 = vsel %vm337, 0, %v519
        %529 = vrot.lane.b32.xlu0 %v510, 16
        %v530 = vpop.permute.xlu0 %529
        %531 = vrot.lane.b32.xlu0 %v511, 16
        %v532 = vpop.permute.xlu0 %531
        %v533 = vsel %vm348, %v530, %v532
        %v536 = vsel %vm351, 0, %v530
        %540 = vrot.lane.b32.xlu0 %v512, 15
        %v541 = vpop.permute.xlu0 %540
        %542 = vrot.lane.b32.xlu0 %v513, 15
        %v543 = vpop.permute.xlu0 %542
        %v544 = vsel %vm361, %v541, %v543
        %v547 = vsel %vm364, 0, %v541
        %549 = vrot.lane.b32.xlu0 %v514, 1
        %v550 = vpop.permute.xlu0 %549
        %551 = vrot.lane.b32.xlu0 %v515, 1
        %v552 = vpop.permute.xlu0 %551
        %v553 = vsel %vm372, %v550, %v552
        %v556 = vsel %vm375, 0, %v550
        %558 = vrot.lane.b32.xlu0 %v512, 127
        %v559 = vpop.permute.xlu0 %558
        %560 = vrot.lane.b32.xlu0 %v513, 127
        %v561 = vpop.permute.xlu0 %560
        %v562 = vsel %vm383, %v559, %v561
        %v565 = vsel %vm386, %v561, 0
        %567 = vrot.lane.b32.xlu0 %v514, 113
        %v568 = vpop.permute.xlu0 %567
        %569 = vrot.lane.b32.xlu0 %v515, 113
        %v570 = vpop.permute.xlu0 %569
        %v571 = vsel %vm394, %v568, %v570
        %v574 = vsel %vm397, %v570, 0
        %576 = vrot.lane.b32.xlu0 %v510, 112
        %v577 = vpop.permute.xlu0 %576
        %578 = vrot.lane.b32.xlu0 %v511, 112
        %v579 = vpop.permute.xlu0 %578
        %v580 = vsel %vm405, %v577, %v579
        %v583 = vsel %vm408, %v579, 0
        %585 = vrot.lane.b32.xlu0 %v512, 111
        %v586 = vpop.permute.xlu0 %585
        %587 = vrot.lane.b32.xlu0 %v513, 111
        %v588 = vpop.permute.xlu0 %587
        %v589 = vsel %vm416, %v586, %v588
        %v592 = vsel %vm419, %v588, 0
        %v594 = vld [vmem:[#allocation5] sm:$0xff]
        %v595 = vld [vmem:[#allocation5 + $0x8] sm:$0xff]
        %v598 = vunpack.c.l.b16 %v594
        %v599 = vunpack.c.h.b16 %v594
        %v600 = vunpack.c.l.b16 %v595
        %v601 = vunpack.c.h.b16 %v595
        %v602 = vpack.c.b16 %v600, %v598
        %v603 = vpack.c.b16 %v601, %v599
        %v606 = vsel %vm351, %v603, 0
        %608 = vmatprep.subr.bf16.mxu0 %v583
        %609 = vmatpush1.bf16.msra.mxu0 %v580
        %610 = vmatprep.subr.bf16.mxu0 %v574
        %611 = vmatpush1.bf16.msra.mxu0 %v571
        %612 = vmatprep.subr.bf16.mxu0 %v565
        %613 = vmatpush1.bf16.msra.mxu0 %v562
        %614 = vmatprep.subr.bf16.mxu0 %v511
        %615 = vmatpush1.bf16.msra.mxu0 %v510
        %616 = vmatprep.subr.bf16.mxu0 %v553
        %617 = vmatpush1.bf16.msra.mxu0 %v556
        %618 = vmatprep.subr.bf16.mxu0 %v544
        %619 = vmatpush1.bf16.msra.mxu0 %v547
        %620 = vmatprep.subr.bf16.mxu0 %v533
        %621 = vmatpush1.bf16.msra.mxu0 %v536
        %622 = vmatprep.subr.bf16.mxu0 %v522
        %623 = vmatpush1.bf16.msra.mxu0 %v525
        %624 = vmatprep.subr.bf16.mxu0 0
        %625 = vmatpush2.bf16.msra.mxu0 0
        %626 = vmatprep.subr.bf16.mxu0 0
        %627 = vmatpush2.bf16.msra.mxu0 0
        %628 = vmatprep.subr.bf16.mxu0 0
        %629 = vmatpush2.bf16.msra.mxu0 0
        %630 = vmatprep.subr.bf16.mxu0 0
        %631 = vmatpush2.bf16.msra.mxu0 0
        %632 = vmatprep.subr.bf16.mxu0 0
        %633 = vmatpush2.bf16.msra.mxu0 0
        %634 = vmatprep.subr.bf16.mxu0 0
        %635 = vmatpush2.bf16.msra.mxu0 0
        %636 = vmatprep.subr.bf16.mxu0 0
        %637 = vmatpush2.bf16.msra.mxu0 0
        %638 = vmatprep.subr.bf16.mxu0 %v592
        %639 = vmatpush2.bf16.msra.mxu0 %v589
        %640 = vmatprep.mubr.bf16.mxu0 %v606
        %641 = vmatmul.mubr.bf16.gmra.mxu0 %v602
        %v642 = vpop.f32.mrf.mxu0
        %v643 = vadd.f32 0.0, %v642
        %v644 = vpop.f32.mrf.mxu0
        %v645 = vadd.f32 0.0, %v644
        %v646 = vpop.f32.mrf.mxu0
        %v647 = vadd.f32 0.0, %v646
        %v648 = vpop.f32.mrf.mxu0
        %v649 = vadd.f32 0.0, %v648
        %650 = vdwg.mxu0
        %651 = vset.pattern.permute.xlu0 2
        %652 = vperm.xlu0 %651, %v296
        %v653 = vpop.permute.xlu0 %652
        %655 = vset.pattern.permute.xlu0 2
        %656 = vperm.xlu0 %655, %v297
        %v657 = vpop.permute.xlu0 %656
        %v659 = vmul.f32 %v643, %v653
        %v660 = vmul.f32 %v645, %v653
        %v661 = vmul.f32 %v647, %v657
        %v662 = vmul.f32 %v649, %v657
        %663 = vset.pattern.permute.xlu0 3
        %664 = vperm.xlu0 %663, %v296
        %v665 = vpop.permute.xlu0 %664
        %667 = vset.pattern.permute.xlu0 3
        %668 = vperm.xlu0 %667, %v297
        %v669 = vpop.permute.xlu0 %668
        %v671 = vadd.f32 %v659, %v665
        %v672 = vadd.f32 %v660, %v665
        %v673 = vadd.f32 %v661, %v669
        %v674 = vadd.f32 %v662, %v669
        %v675 = vmax.f32 %v671, 0.0
        %v676 = vmax.f32 %v672, 0.0
        %v677 = vmax.f32 %v673, 0.0
        %v678 = vmax.f32 %v674, 0.0
        %v679 = vld [vmem:[%s3] sm:$0xf]
        %v680 = vld [vmem:[%s3 + $0x4] sm:$0xf]
        %v681 = vpack.c.bf16 %v677, %v675
        %v682 = vpack.c.bf16 %v678, %v676
        %683 = vset.pattern.permute.xlu0 4
        %684 = vperm.xlu0 %683, %v296
        %v685 = vpop.permute.xlu0 %684
        %687 = vset.pattern.permute.xlu0 4
        %688 = vperm.xlu0 %687, %v297
        %v689 = vpop.permute.xlu0 %688
        %v693 = vunpack.c.l.b16 %v679
        %v694 = vunpack.c.l.b16 %v680
        %v695 = vpack.c.b16 %v694, %v693
        %v697 = vsel %vm351, %v695, 0
        %699 = vmatprep.subr.bf16.mxu0 0
        %700 = vmatpush1.bf16.msra.mxu0 0
        %701 = vmatprep.subr.bf16.mxu0 0
        %702 = vmatpush1.bf16.msra.mxu0 0
        %703 = vmatprep.subr.bf16.mxu0 0
        %704 = vmatpush1.bf16.msra.mxu0 0
        %705 = vmatprep.subr.bf16.mxu0 0
        %706 = vmatpush1.bf16.msra.mxu0 0
        %707 = vmatprep.subr.bf16.mxu0 0
        %708 = vmatpush1.bf16.msra.mxu0 0
        %709 = vmatprep.subr.bf16.mxu0 0
        %710 = vmatpush1.bf16.msra.mxu0 0
        %711 = vmatprep.subr.bf16.mxu0 0
        %712 = vmatpush1.bf16.msra.mxu0 0
        %713 = vmatprep.subr.bf16.mxu0 %v682
        %714 = vmatpush1.bf16.msra.mxu0 %v681
        %715 = vmatprep.subr.bf16.mxu0 0
        %716 = vmatpush2.bf16.msra.mxu0 0
        %717 = vmatprep.subr.bf16.mxu0 0
        %718 = vmatpush2.bf16.msra.mxu0 0
        %719 = vmatprep.subr.bf16.mxu0 0
        %720 = vmatpush2.bf16.msra.mxu0 0
        %721 = vmatprep.subr.bf16.mxu0 0
        %722 = vmatpush2.bf16.msra.mxu0 0
        %723 = vmatprep.subr.bf16.mxu0 0
        %724 = vmatpush2.bf16.msra.mxu0 0
        %725 = vmatprep.subr.bf16.mxu0 0
        %726 = vmatpush2.bf16.msra.mxu0 0
        %727 = vmatprep.subr.bf16.mxu0 0
        %728 = vmatpush2.bf16.msra.mxu0 0
        %729 = vmatprep.subr.bf16.mxu0 0
        %730 = vmatpush2.bf16.msra.mxu0 0
        %731 = vmatprep.mubr.bf16.mxu0 0
        %732 = vmatmul.mubr.bf16.gmra.mxu0 %v697
        %v733 = vpop.f32.mrf.mxu0
        %v734 = vadd.f32 %v685, %v733
        %v735 = vpop.f32.mrf.mxu0
        %v736 = vadd.f32 %v685, %v735
        %v737 = vpop.f32.mrf.mxu0
        %v738 = vadd.f32 %v689, %v737
        %v739 = vpop.f32.mrf.mxu0
        %v740 = vadd.f32 %v689, %v739
        %741 = vdwg.mxu0
        %v742 = vadd.f32 %v734, %v261
        %v743 = vadd.f32 %v736, %v262
        %v744 = vadd.f32 %v738, %v263
        %v745 = vadd.f32 %v740, %v264
        %746 = vst [vmem:[%s257] sm:$0xff] %v742
        %747 = vst [vmem:[%s257 + $0x8] sm:$0xff] %v743
        %748 = vst [vmem:[%s257 + $0x10] sm:$0xff] %v744
        %749 = vst [vmem:[%s257 + $0x18] sm:$0xff] %v745
        %s750 = sand.u32 %s141, 1
        %s751 = scalar_lea.sflag [#allocation4], %s750
        %s752 = sand.u32 %s141, 1
        %s753 = smul.addr %s752, 32
        %s754 = scalar_lea.vmem [#allocation7], %s753
        // Predicated region
        $region49: #{tpu_custom_call.1} parent=39 // pred_check
          %p755 = pneg %p151
        $region50: #{tpu_custom_call.1} parent=39 // pred_check_branch
          %757 = sbr.rel (%p755) target = $region52
        $region51: #{tpu_custom_call.1} parent=39 // pred_region
          %s759 = ssub.s32 512, 512
          %760 = vsyncadd %s751, %s759
          %s761 = smul.addr %s23, 4
          %s762 = smul.addr %s761, 128
          %s763 = scalar_lea.hbm %s5, %s762
          %s764 = sshll.u32 %s754, 4
          %s765 = int_to_ptr.vmem [resolvable:$true] %s764
          %770 = dma.vmem_to_hbm [thread:$0]  %s765, 512, %s763, %s751, 256, 256, 16
        $region52: #{tpu_custom_call.1} parent=39 // pred_fallthru
          _
      $region40: #{tpu_custom_call.1} parent=5 // pred_fallthru
        _
      %p771 = scmp.le.s32.totalorder 2, %s18
      // Predicated region
      $region53: #{tpu_custom_call.1} parent=5 // pred_check
        %p772 = pneg %p771
      $region54: #{tpu_custom_call.1} parent=5 // pred_check_branch
        %774 = sbr.rel (%p772) target = $region56
      $region55: #{tpu_custom_call.1} parent=5 // pred_region
        %s775 = ssub.s32 %s18, 2
        // Predicated region
        $region57: #{tpu_custom_call.1} parent=55 // pred_check
          %p776 = pneg %p157
        $region58: #{tpu_custom_call.1} parent=55 // pred_check_branch
          %778 = sbr.rel (%p776) target = $region60
        $region59: #{tpu_custom_call.1} parent=55 // pred_region
          %s779 = sand.u32 %s142, 1
          %s780 = scalar_lea.sflag [#allocation4], %s779
          %s781 = sand.u32 %s142, 1
          %s782 = smul.addr %s781, 32
          %s783 = scalar_lea.vmem [#allocation7], %s782
          %784 = dma.done %s780, 512
        $region60: #{tpu_custom_call.1} parent=55 // pred_fallthru
          _
      $region56: #{tpu_custom_call.1} parent=5 // pred_fallthru
        _
    $region6: #{tpu_custom_call.1} parent=1 // loop_footer
      %s22 = sadd.s32 1, %s18
    $region7: #{tpu_custom_call.1} parent=1 // loop_footer_branch
      %17 = sbr.rel target = $region3
    $region8: #{tpu_custom_call.1} parent=1 // loop_exit
      _
    %785 = vsyncpa [#allocation3], 1
    %s786 = scalar_lea.sflag [#allocation3], 1
    %787 = vsyncpa %s786, 1
    %788 = vsyncpa [#allocation6], 1
    %789 = vsyncpa [#allocation4], 1
    %s790 = scalar_lea.sflag [#allocation4], 1
    %791 = vsyncpa %s790, 1

</llo_original>
